<compile_context>
chip_gen: v5e
topology: v5e:2x2
jax: 0.10.0
libtpu: 0.0.40
codegen_flags: <defaults>
</compile_context>

<pallas_src>
import numpy as np
import jax
import jax.numpy as jnp
from jax.experimental import pallas as pl
from jax.experimental.pallas import tpu as pltpu

BN_EPS = 1e-5


# ---------------------------------------------------------------------------
# Fused kernel
# ---------------------------------------------------------------------------
def _make_fused_kernel(num_layers, BT, L0, C, H, K0, K):
    """Build the fused conv-stack + MLP-head kernel (all sizes static)."""
    n_conv = 2 * num_layers
    pad = (K - 1) // 2                              # 'same' padding of the 3-tap convs

    def kernel(*refs):
        xin_ref = refs[0]                           # (BT, L0 + K0 - 1, 1) padded input
        conv_refs = refs[1:1 + n_conv]              # (w_i, b_i) folded conv params
        hs = 1 + n_conv
        w1_ref, b1_ref, w2_ref, b2_ref, w3_ref, b3_ref = refs[hs:hs + 6]
        out_ref = refs[hs + 6]                      # (BT, 1)
        act_ref = refs[hs + 7]                      # (BT, L0 + 4*pad, C) shared scratch

        # ---- layer 0: Conv1d(1->C, K0) as K0 batched broadcast FMAs on the VPU ----
        w0_ref, b0_ref = conv_refs[0], conv_refs[1]
        acc = jnp.zeros((BT, L0, C), jnp.float32)
        for k in range(K0):                         # (BT,L0,1) * (1,C) broadcast FMA
            acc = acc + xin_ref[:, k:k + L0, :] * w0_ref[k:k + 1, :]
        z = jnp.maximum(acc + b0_ref[...], 0.0)     # (BT, L0, C)
        cur_L = L0

        # Leading zero margin written once; it stays zero across all layers.
        if num_layers > 1:
            act_ref[:, 0:2 * pad, :] = jnp.zeros((BT, 2 * pad, C), jnp.float32)

        # ---- layers 1..num_layers-1: fused MaxPool + im2col + ONE matmul each ----
        for i in range(1, num_layers):
            wi_ref, bi_ref = conv_refs[2 * i], conv_refs[2 * i + 1]
            # stash the un-pooled activation; only the (moving) tail margin is re-zeroed
            act_ref[:, 2 * pad:2 * pad + cur_L, :] = z
            act_ref[:, 2 * pad + cur_L:4 * pad + cur_L, :] = (
                jnp.zeros((BT, 2 * pad, C), jnp.float32))
            Lh = cur_L // 2
            # window_k[b, l, :] = max(S[b, 2(l+k)], S[b, 2(l+k)+1])  (pool ⊂ gather)
            wins = []
            for k in range(K):
                ev = act_ref[:, pl.ds(2 * k, Lh, 2), :]
                od = act_ref[:, pl.ds(2 * k + 1, Lh, 2), :]
                wins.append(jnp.maximum(ev, od))
            X = jnp.concatenate(wins, axis=2).reshape(BT * Lh, K * C)   # im2col
            y = jnp.dot(X, wi_ref[...], preferred_element_type=jnp.float32)
            z = jnp.maximum(y + bi_ref[...], 0.0).reshape(BT, Lh, C)
            cur_L = Lh

        # ---- final MaxPool + flatten (feature order l*C + c; w1 reordered on host) ----
        act_ref[:, 0:cur_L, :] = z
        L_f = cur_L // 2
        pieces = [jnp.max(act_ref[:, 2 * l:2 * l + 2, :], axis=1)      # (BT, C)
                  for l in range(L_f)]
        flat = jnp.concatenate(pieces, axis=1)                          # (BT, L_f*C)

        # ---- MLP head: three batched matmuls ----
        # TODO(synk): nn.Dropout is identity in eval mode; train-mode dropout not implemented.
        h = jnp.maximum(jnp.dot(flat, w1_ref[...],
                                preferred_element_type=jnp.float32) + b1_ref[...], 0.0)
        h = jnp.maximum(jnp.dot(h, w2_ref[...],
                                preferred_element_type=jnp.float32) + b2_ref[...], 0.0)
        out_ref[...] = jnp.dot(h, w3_ref[...],
                               preferred_element_type=jnp.float32) + b3_ref[...]

    return kernel


# ---------------------------------------------------------------------------
# Host-side wrapper
# ---------------------------------------------------------------------------
def _fold_bn(p):
    """Fold eval-mode BatchNorm + conv bias into the conv weights."""
    scale = p["gamma"] / jnp.sqrt(p["var"] + BN_EPS)          # (1, C)
    w = p["w"] * scale[0]                                     # (K, C_in, C) * (C,)
    b = (p["b"] - p["mean"]) * scale + p["beta"]              # (1, C)
    return w, b


def cnn_light_forward(x_ncl, params):
    """x_ncl: (N, 1, length), exactly like the PyTorch module input. Returns (N, 1)."""
    N, _, L0 = x_ncl.shape
    blocks = params["blocks"]
    num_layers = len(blocks)
    K0 = blocks[0]["w"].shape[0]
    C = blocks[0]["w"].shape[2]
    K = blocks[1]["w"].shape[0] if num_layers > 1 else 3
    pad = (K - 1) // 2
    w1, b1, w2, b2, w3, b3 = params["head"]
    H = w1.shape[1]
    assert L0 % (2 ** num_layers) == 0, "length must be divisible by 2**num_layers"
    L_f = L0 // (2 ** num_layers)
    assert w1.shape[0] == L_f * C

    # Fold BN + conv bias on the host; reshape layer>=1 weights to im2col (K*C_in, C_out).
    conv_args = []
    for i, p in enumerate(blocks):
        w, b = _fold_bn(p)
        if i == 0:
            w = w[:, 0, :]                                    # C_in == 1 -> (K0, C)
        else:
            w = w.reshape(K * C, C)                           # lane order k*C + ci
        conv_args += [w, b]

    # Reorder w1 rows from PyTorch's channel-major flatten (c*L_f + l) to (l*C + c).
    w1r = jnp.transpose(w1.reshape(C, L_f, H), (1, 0, 2)).reshape(L_f * C, H)

    # Pad the input ONCE, channels-last.
    pad0 = (K0 - 1) // 2
    x_nl = jnp.transpose(x_ncl, (0, 2, 1))                    # (N, L0, 1)
    xp = jnp.pad(x_nl, ((0, 0), (pad0, pad0), (0, 0)))
    Lp0 = L0 + 2 * pad0

    # Batch-tile heuristic: whole batch for tiny N (single step); otherwise a multiple
    # of 8 grown to amortize the ~0.35us/step overhead (v5e/v6e) while keeping >= 2
    # "parallel" grid steps so v7x's two TensorCores both get work.
    if N <= 8 or N % 8 != 0:
        BT = N
    else:
        BT = 8
        while BT * 2 <= 128 and N % (BT * 2) == 0 and N // (BT * 2) >= 2:
            BT *= 2
    assert N % BT == 0

    args = [xp] + conv_args + [w1r, b1, w2, b2, w3, b3]
    in_specs = [pl.BlockSpec((BT, Lp0, 1), lambda g: (g, 0, 0))]
    for a in args[1:]:                                        # grid-invariant full blocks
        in_specs.append(pl.BlockSpec(tuple(a.shape),
                                     lambda g, nd=a.ndim: (0,) * nd))

    # Single shared activation scratch (VMEM); fits easily in v7x's 64 MiB at these sizes.
    R = L0 + 4 * pad
    scratch = [pltpu.VMEM((BT, R, C), jnp.float32)]

    kernel = _make_fused_kernel(num_layers, BT, L0, C, H, K0, K)

    return pl.pallas_call(
        kernel,
        out_shape=jax.ShapeDtypeStruct((N, 1), jnp.float32),
        grid=(N // BT,),
        in_specs=in_specs,
        out_specs=pl.BlockSpec((BT, 1), lambda g: (g, 0)),
        scratch_shapes=scratch,
        compiler_params=pltpu.CompilerParams(
            dimension_semantics=("parallel",)),               # v7x: shard tiles over 2 TCs
    )(*args)


# ---------------------------------------------------------------------------
# Deterministic parameter init (shapes follow CNN_Light.__init__)
# ---------------------------------------------------------------------------
def init_params(key, length, channel, num_layers, num_neu):
    def uniform(k, shape, bound):
        return jax.random.uniform(k, shape, jnp.float32, -bound, bound)

    blocks = []
    c_in, L = 1, length
    for i in range(num_layers):
        K = 7 if i == 0 else 3
        c_out = channel
        key, kw, kb, kg, kbe, km, kv = jax.random.split(key, 7)
        bound = 1.0 / float(np.sqrt(c_in * K))
        w_oik = uniform(kw, (c_out, c_in, K), bound)          # PyTorch Conv1d layout
        blocks.append(dict(
            w=jnp.transpose(w_oik, (2, 1, 0)),                # -> (K, C_in, C_out)
            b=uniform(kb, (1, c_out), bound),
            gamma=1.0 + 0.1 * jax.random.normal(kg, (1, c_out), jnp.float32),
            beta=0.1 * jax.random.normal(kbe, (1, c_out), jnp.float32),
            mean=0.1 * jax.random.normal(km, (1, c_out), jnp.float32),
            var=1.0 + 0.1 * jnp.abs(jax.random.normal(kv, (1, c_out), jnp.float32)),
        ))
        c_in = c_out
        L = L // 2

    feat = L * channel

    def linear(k, fan_in, fan_out):
        k1, k2 = jax.random.split(k)
        bound = 1.0 / float(np.sqrt(fan_in))
        # stored pre-transposed: (fan_in, fan_out), bias (1, fan_out)
        return uniform(k1, (fan_in, fan_out), bound), uniform(k2, (1, fan_out), bound)

    key, k1, k2, k3 = jax.random.split(key, 4)
    w1, b1 = linear(k1, feat, num_neu)
    w2, b2 = linear(k2, num_neu, num_neu)
    w3, b3 = linear(k3, num_neu, 1)
    return dict(blocks=blocks, head=(w1, b1, w2, b2, w3, b3))


# ---------------------------------------------------------------------------
# Pure-JAX reference (unfolded params) for correctness check
# ---------------------------------------------------------------------------
def reference_forward(x_ncl, params):
    x = jnp.transpose(x_ncl, (0, 2, 1))                       # (N, L, C)
    for p in params["blocks"]:
        K = p["w"].shape[0]
        pad = (K - 1) // 2
        N, L, _ = x.shape
        xp = jnp.pad(x, ((0, 0), (pad, pad), (0, 0)))
        y = sum(jnp.einsum("nlc,co->nlo", xp[:, k:k + L, :], p["w"][k])
                for k in range(K))
        y = y + p["b"]
        y = (y - p["mean"]) / jnp.sqrt(p["var"] + BN_EPS) * p["gamma"] + p["beta"]
        y = jnp.maximum(y, 0.0)
        Lh = L // 2
        x = jnp.maximum(y[:, 0:2 * Lh:2, :], y[:, 1:2 * Lh:2, :])
    N = x.shape[0]
    f = jnp.transpose(x, (0, 2, 1)).reshape(N, -1)            # channel-major flatten
    w1, b1, w2, b2, w3, b3 = params["head"]
    h = jnp.maximum(f @ w1 + b1, 0.0)
    h = jnp.maximum(h @ w2 + b2, 0.0)
    return h @ w3 + b3


# ---------------------------------------------------------------------------
if __name__ == "__main__":
    length, channel, num_layers, num_neu, pdrop = 32, 4, 2, 32, 0.1
    batch = 2

    key = jax.random.PRNGKey(0)
    pkey, xkey = jax.random.split(key)
    params = init_params(pkey, length, channel, num_layers, num_neu)
    x = jax.random.normal(xkey, (batch, 1, length), jnp.float32)

    out = jax.block_until_ready(cnn_light_forward(x, params))
    assert out.shape == (batch, 1), out.shape

    ref = jax.block_until_ready(reference_forward(x, params))
    np.testing.assert_allclose(np.asarray(out), np.asarray(ref),
                               rtol=2e-3, atol=2e-3)
    print("KERNEL_OK")
</pallas_src>

<mosaic_0001>
module attributes {stable_mosaic.version = 11 : i64} {
  func.func @kernel(%arg0: i32, %arg1: memref<2x38x1xf32, #tpu.memory_space<vmem>>, %arg2: memref<7x4xf32, #tpu.memory_space<vmem>>, %arg3: memref<1x4xf32, #tpu.memory_space<vmem>>, %arg4: memref<12x4xf32, #tpu.memory_space<vmem>>, %arg5: memref<1x4xf32, #tpu.memory_space<vmem>>, %arg6: memref<32x32xf32, #tpu.memory_space<vmem>>, %arg7: memref<1x32xf32, #tpu.memory_space<vmem>>, %arg8: memref<32x32xf32, #tpu.memory_space<vmem>>, %arg9: memref<1x32xf32, #tpu.memory_space<vmem>>, %arg10: memref<32x1xf32, #tpu.memory_space<vmem>>, %arg11: memref<1x1xf32, #tpu.memory_space<vmem>>, %arg12: memref<2x1xf32, #tpu.memory_space<vmem>>, %arg13: memref<2x36x4xf32, #tpu.memory_space<vmem>>) attributes {dimension_semantics = [#tpu.dimension_semantics<parallel>], iteration_bounds = array<i64: 1>, scalar_prefetch = 0 : i64, scratch_operands = 1 : i64, tpu.core_type = #tpu.core_type<tc>, window_params = [{transform_indices = @transform_0, window_bounds = array<i64: 2, 38, 1>}, {pipeline_mode = #tpu.pipeline_mode<synchronous>, transform_indices = @transform_1, window_bounds = array<i64: 7, 4>}, {pipeline_mode = #tpu.pipeline_mode<synchronous>, transform_indices = @transform_2, window_bounds = array<i64: 1, 4>}, {pipeline_mode = #tpu.pipeline_mode<synchronous>, transform_indices = @transform_3, window_bounds = array<i64: 12, 4>}, {pipeline_mode = #tpu.pipeline_mode<synchronous>, transform_indices = @transform_4, window_bounds = array<i64: 1, 4>}, {pipeline_mode = #tpu.pipeline_mode<synchronous>, transform_indices = @transform_5, window_bounds = array<i64: 32, 32>}, {pipeline_mode = #tpu.pipeline_mode<synchronous>, transform_indices = @transform_6, window_bounds = array<i64: 1, 32>}, {pipeline_mode = #tpu.pipeline_mode<synchronous>, transform_indices = @transform_7, window_bounds = array<i64: 32, 32>}, {pipeline_mode = #tpu.pipeline_mode<synchronous>, transform_indices = @transform_8, window_bounds = array<i64: 1, 32>}, {pipeline_mode = #tpu.pipeline_mode<synchronous>, transform_indices = @transform_9, window_bounds = array<i64: 32, 1>}, {pipeline_mode = #tpu.pipeline_mode<synchronous>, transform_indices = @transform_10, window_bounds = array<i64: 1, 1>}, {transform_indices = @transform_11, window_bounds = array<i64: 2, 1>}]} {
    %cst = arith.constant 0.000000e+00 : f32
    %0 = vector.broadcast %cst : f32 to vector<2x32x4xf32>
    %c0 = arith.constant 0 : index
    %c0_0 = arith.constant 0 : index
    %c0_1 = arith.constant 0 : index
    %1 = vector.load %arg1[%c0, %c0_0, %c0_1] : memref<2x38x1xf32, #tpu.memory_space<vmem>>, vector<2x32x1xf32>
    %c0_2 = arith.constant 0 : index
    %c0_3 = arith.constant 0 : index
    %2 = vector.load %arg2[%c0_2, %c0_3] : memref<7x4xf32, #tpu.memory_space<vmem>>, vector<1x4xf32>
    %3 = vector.shape_cast %2 : vector<1x4xf32> to vector<1x1x4xf32>
    %4 = vector.broadcast %1 : vector<2x32x1xf32> to vector<2x32x4xf32>
    %5 = vector.broadcast %3 : vector<1x1x4xf32> to vector<2x32x4xf32>
    %6 = arith.mulf %4, %5 : vector<2x32x4xf32>
    %7 = arith.addf %0, %6 : vector<2x32x4xf32>
    %c0_4 = arith.constant 0 : index
    %c1 = arith.constant 1 : index
    %c0_5 = arith.constant 0 : index
    %8 = vector.load %arg1[%c0_4, %c1, %c0_5] : memref<2x38x1xf32, #tpu.memory_space<vmem>>, vector<2x32x1xf32>
    %c1_6 = arith.constant 1 : index
    %c0_7 = arith.constant 0 : index
    %9 = vector.load %arg2[%c1_6, %c0_7] : memref<7x4xf32, #tpu.memory_space<vmem>>, vector<1x4xf32>
    %10 = vector.shape_cast %9 : vector<1x4xf32> to vector<1x1x4xf32>
    %11 = vector.broadcast %8 : vector<2x32x1xf32> to vector<2x32x4xf32>
    %12 = vector.broadcast %10 : vector<1x1x4xf32> to vector<2x32x4xf32>
    %13 = arith.mulf %11, %12 : vector<2x32x4xf32>
    %14 = arith.addf %7, %13 : vector<2x32x4xf32>
    %c0_8 = arith.constant 0 : index
    %c2 = arith.constant 2 : index
    %c0_9 = arith.constant 0 : index
    %15 = vector.load %arg1[%c0_8, %c2, %c0_9] : memref<2x38x1xf32, #tpu.memory_space<vmem>>, vector<2x32x1xf32>
    %c2_10 = arith.constant 2 : index
    %c0_11 = arith.constant 0 : index
    %16 = vector.load %arg2[%c2_10, %c0_11] : memref<7x4xf32, #tpu.memory_space<vmem>>, vector<1x4xf32>
    %17 = vector.shape_cast %16 : vector<1x4xf32> to vector<1x1x4xf32>
    %18 = vector.broadcast %15 : vector<2x32x1xf32> to vector<2x32x4xf32>
    %19 = vector.broadcast %17 : vector<1x1x4xf32> to vector<2x32x4xf32>
    %20 = arith.mulf %18, %19 : vector<2x32x4xf32>
    %21 = arith.addf %14, %20 : vector<2x32x4xf32>
    %c0_12 = arith.constant 0 : index
    %c3 = arith.constant 3 : index
    %c0_13 = arith.constant 0 : index
    %22 = vector.load %arg1[%c0_12, %c3, %c0_13] : memref<2x38x1xf32, #tpu.memory_space<vmem>>, vector<2x32x1xf32>
    %c3_14 = arith.constant 3 : index
    %c0_15 = arith.constant 0 : index
    %23 = vector.load %arg2[%c3_14, %c0_15] : memref<7x4xf32, #tpu.memory_space<vmem>>, vector<1x4xf32>
    %24 = vector.shape_cast %23 : vector<1x4xf32> to vector<1x1x4xf32>
    %25 = vector.broadcast %22 : vector<2x32x1xf32> to vector<2x32x4xf32>
    %26 = vector.broadcast %24 : vector<1x1x4xf32> to vector<2x32x4xf32>
    %27 = arith.mulf %25, %26 : vector<2x32x4xf32>
    %28 = arith.addf %21, %27 : vector<2x32x4xf32>
    %c0_16 = arith.constant 0 : index
    %c4 = arith.constant 4 : index
    %c0_17 = arith.constant 0 : index
    %29 = vector.load %arg1[%c0_16, %c4, %c0_17] : memref<2x38x1xf32, #tpu.memory_space<vmem>>, vector<2x32x1xf32>
    %c4_18 = arith.constant 4 : index
    %c0_19 = arith.constant 0 : index
    %30 = vector.load %arg2[%c4_18, %c0_19] : memref<7x4xf32, #tpu.memory_space<vmem>>, vector<1x4xf32>
    %31 = vector.shape_cast %30 : vector<1x4xf32> to vector<1x1x4xf32>
    %32 = vector.broadcast %29 : vector<2x32x1xf32> to vector<2x32x4xf32>
    %33 = vector.broadcast %31 : vector<1x1x4xf32> to vector<2x32x4xf32>
    %34 = arith.mulf %32, %33 : vector<2x32x4xf32>
    %35 = arith.addf %28, %34 : vector<2x32x4xf32>
    %c0_20 = arith.constant 0 : index
    %c5 = arith.constant 5 : index
    %c0_21 = arith.constant 0 : index
    %36 = vector.load %arg1[%c0_20, %c5, %c0_21] : memref<2x38x1xf32, #tpu.memory_space<vmem>>, vector<2x32x1xf32>
    %c5_22 = arith.constant 5 : index
    %c0_23 = arith.constant 0 : index
    %37 = vector.load %arg2[%c5_22, %c0_23] : memref<7x4xf32, #tpu.memory_space<vmem>>, vector<1x4xf32>
    %38 = vector.shape_cast %37 : vector<1x4xf32> to vector<1x1x4xf32>
    %39 = vector.broadcast %36 : vector<2x32x1xf32> to vector<2x32x4xf32>
    %40 = vector.broadcast %38 : vector<1x1x4xf32> to vector<2x32x4xf32>
    %41 = arith.mulf %39, %40 : vector<2x32x4xf32>
    %42 = arith.addf %35, %41 : vector<2x32x4xf32>
    %c0_24 = arith.constant 0 : index
    %c6 = arith.constant 6 : index
    %c0_25 = arith.constant 0 : index
    %43 = vector.load %arg1[%c0_24, %c6, %c0_25] : memref<2x38x1xf32, #tpu.memory_space<vmem>>, vector<2x32x1xf32>
    %c6_26 = arith.constant 6 : index
    %c0_27 = arith.constant 0 : index
    %44 = vector.load %arg2[%c6_26, %c0_27] : memref<7x4xf32, #tpu.memory_space<vmem>>, vector<1x4xf32>
    %45 = vector.shape_cast %44 : vector<1x4xf32> to vector<1x1x4xf32>
    %46 = vector.broadcast %43 : vector<2x32x1xf32> to vector<2x32x4xf32>
    %47 = vector.broadcast %45 : vector<1x1x4xf32> to vector<2x32x4xf32>
    %48 = arith.mulf %46, %47 : vector<2x32x4xf32>
    %49 = arith.addf %42, %48 : vector<2x32x4xf32>
    %c0_28 = arith.constant 0 : index
    %c0_29 = arith.constant 0 : index
    %50 = vector.load %arg3[%c0_28, %c0_29] : memref<1x4xf32, #tpu.memory_space<vmem>>, vector<1x4xf32>
    %51 = vector.shape_cast %50 : vector<1x4xf32> to vector<1x1x4xf32>
    %52 = vector.broadcast %51 : vector<1x1x4xf32> to vector<2x32x4xf32>
    %53 = arith.addf %49, %52 : vector<2x32x4xf32>
    %cst_30 = arith.constant 0.000000e+00 : f32
    %54 = vector.broadcast %cst_30 : f32 to vector<2x32x4xf32>
    %55 = arith.maximumf %53, %54 : vector<2x32x4xf32>
    %cst_31 = arith.constant 0.000000e+00 : f32
    %56 = vector.broadcast %cst_31 : f32 to vector<2x2x4xf32>
    %c0_32 = arith.constant 0 : index
    %c0_33 = arith.constant 0 : index
    %c0_34 = arith.constant 0 : index
    %57 = vector.load %arg13[%c0_32, %c0_33, %c0_34] : memref<2x36x4xf32, #tpu.memory_space<vmem>>, vector<2x2x4xf32>
    tpu.vector_store %arg13[%c0_32, %c0_33, %c0_34], %56 {strides = array<i32>} : memref<2x36x4xf32, #tpu.memory_space<vmem>>, vector<2x2x4xf32>,
    %c0_35 = arith.constant 0 : index
    %c2_36 = arith.constant 2 : index
    %c0_37 = arith.constant 0 : index
    %58 = vector.load %arg13[%c0_35, %c2_36, %c0_37] : memref<2x36x4xf32, #tpu.memory_space<vmem>>, vector<2x32x4xf32>
    tpu.vector_store %arg13[%c0_35, %c2_36, %c0_37], %55 {strides = array<i32>} : memref<2x36x4xf32, #tpu.memory_space<vmem>>, vector<2x32x4xf32>,
    %cst_38 = arith.constant 0.000000e+00 : f32
    %59 = vector.broadcast %cst_38 : f32 to vector<2x2x4xf32>
    %c0_39 = arith.constant 0 : index
    %c34 = arith.constant 34 : index
    %c0_40 = arith.constant 0 : index
    %60 = vector.load %arg13[%c0_39, %c34, %c0_40] : memref<2x36x4xf32, #tpu.memory_space<vmem>>, vector<2x2x4xf32>
    tpu.vector_store %arg13[%c0_39, %c34, %c0_40], %59 {strides = array<i32>} : memref<2x36x4xf32, #tpu.memory_space<vmem>>, vector<2x2x4xf32>,
    %c0_41 = arith.constant 0 : index
    %c0_42 = arith.constant 0 : index
    %c0_43 = arith.constant 0 : index
    %61 = tpu.strided_load %arg13[%c0_41, %c0_42, %c0_43] {strides = array<i32: 1, 2, 1>} : memref<2x36x4xf32, #tpu.memory_space<vmem>>, vector<2x16x4xf32>
    %c0_44 = arith.constant 0 : index
    %c1_45 = arith.constant 1 : index
    %c0_46 = arith.constant 0 : index
    %62 = tpu.strided_load %arg13[%c0_44, %c1_45, %c0_46] {strides = array<i32: 1, 2, 1>} : memref<2x36x4xf32, #tpu.memory_space<vmem>>, vector<2x16x4xf32>
    %63 = arith.maximumf %61, %62 : vector<2x16x4xf32>
    %c0_47 = arith.constant 0 : index
    %c2_48 = arith.constant 2 : index
    %c0_49 = arith.constant 0 : index
    %64 = tpu.strided_load %arg13[%c0_47, %c2_48, %c0_49] {strides = array<i32: 1, 2, 1>} : memref<2x36x4xf32, #tpu.memory_space<vmem>>, vector<2x16x4xf32>
    %c0_50 = arith.constant 0 : index
    %c3_51 = arith.constant 3 : index
    %c0_52 = arith.constant 0 : index
    %65 = tpu.strided_load %arg13[%c0_50, %c3_51, %c0_52] {strides = array<i32: 1, 2, 1>} : memref<2x36x4xf32, #tpu.memory_space<vmem>>, vector<2x16x4xf32>
    %66 = arith.maximumf %64, %65 : vector<2x16x4xf32>
    %c0_53 = arith.constant 0 : index
    %c4_54 = arith.constant 4 : index
    %c0_55 = arith.constant 0 : index
    %67 = tpu.strided_load %arg13[%c0_53, %c4_54, %c0_55] {strides = array<i32: 1, 2, 1>} : memref<2x36x4xf32, #tpu.memory_space<vmem>>, vector<2x16x4xf32>
    %c0_56 = arith.constant 0 : index
    %c5_57 = arith.constant 5 : index
    %c0_58 = arith.constant 0 : index
    %68 = tpu.strided_load %arg13[%c0_56, %c5_57, %c0_58] {strides = array<i32: 1, 2, 1>} : memref<2x36x4xf32, #tpu.memory_space<vmem>>, vector<2x16x4xf32>
    %69 = arith.maximumf %67, %68 : vector<2x16x4xf32>
    %70 = tpu.concatenate %63, %66, %69 in 2 : vector<2x16x4xf32>, vector<2x16x4xf32>, vector<2x16x4xf32> -> vector<2x16x12xf32>
    %71 = vector.shape_cast %70 : vector<2x16x12xf32> to vector<32x12xf32>
    %c0_59 = arith.constant 0 : index
    %c0_60 = arith.constant 0 : index
    %72 = vector.load %arg4[%c0_59, %c0_60] : memref<12x4xf32, #tpu.memory_space<vmem>>, vector<12x4xf32>
    %cst_61 = arith.constant dense<0.000000e+00> : vector<32x4xf32>
    %73 = tpu.matmul %71, %72, %cst_61 {dimension_numbers = #tpu.dot_dimension_numbers<[1], [0], [0], [1], [0, 0, 1, 1], [], []>} : vector<32x12xf32>, vector<12x4xf32>, vector<32x4xf32> -> vector<32x4xf32>
    %c0_62 = arith.constant 0 : index
    %c0_63 = arith.constant 0 : index
    %74 = vector.load %arg5[%c0_62, %c0_63] : memref<1x4xf32, #tpu.memory_space<vmem>>, vector<1x4xf32>
    %75 = vector.broadcast %74 : vector<1x4xf32> to vector<32x4xf32>
    %76 = arith.addf %73, %75 : vector<32x4xf32>
    %cst_64 = arith.constant 0.000000e+00 : f32
    %77 = vector.broadcast %cst_64 : f32 to vector<32x4xf32>
    %78 = arith.maximumf %76, %77 : vector<32x4xf32>
    %79 = vector.shape_cast %78 : vector<32x4xf32> to vector<2x16x4xf32>
    %c0_65 = arith.constant 0 : index
    %c0_66 = arith.constant 0 : index
    %c0_67 = arith.constant 0 : index
    %80 = vector.load %arg13[%c0_65, %c0_66, %c0_67] : memref<2x36x4xf32, #tpu.memory_space<vmem>>, vector<2x16x4xf32>
    tpu.vector_store %arg13[%c0_65, %c0_66, %c0_67], %79 {strides = array<i32>} : memref<2x36x4xf32, #tpu.memory_space<vmem>>, vector<2x16x4xf32>,
    %c0_68 = arith.constant 0 : index
    %c0_69 = arith.constant 0 : index
    %c0_70 = arith.constant 0 : index
    %81 = vector.load %arg13[%c0_68, %c0_69, %c0_70] : memref<2x36x4xf32, #tpu.memory_space<vmem>>, vector<2x2x4xf32>
    %cst_71 = arith.constant dense<0xFF800000> : vector<2x4xf32>
    %82 = vector.multi_reduction <maximumf>, %81, %cst_71 [1] : vector<2x2x4xf32> to vector<2x4xf32>
    %c0_72 = arith.constant 0 : index
    %c2_73 = arith.constant 2 : index
    %c0_74 = arith.constant 0 : index
    %83 = vector.load %arg13[%c0_72, %c2_73, %c0_74] : memref<2x36x4xf32, #tpu.memory_space<vmem>>, vector<2x2x4xf32>
    %cst_75 = arith.constant dense<0xFF800000> : vector<2x4xf32>
    %84 = vector.multi_reduction <maximumf>, %83, %cst_75 [1] : vector<2x2x4xf32> to vector<2x4xf32>
    %c0_76 = arith.constant 0 : index
    %c4_77 = arith.constant 4 : index
    %c0_78 = arith.constant 0 : index
    %85 = vector.load %arg13[%c0_76, %c4_77, %c0_78] : memref<2x36x4xf32, #tpu.memory_space<vmem>>, vector<2x2x4xf32>
    %cst_79 = arith.constant dense<0xFF800000> : vector<2x4xf32>
    %86 = vector.multi_reduction <maximumf>, %85, %cst_79 [1] : vector<2x2x4xf32> to vector<2x4xf32>
    %c0_80 = arith.constant 0 : index
    %c6_81 = arith.constant 6 : index
    %c0_82 = arith.constant 0 : index
    %87 = vector.load %arg13[%c0_80, %c6_81, %c0_82] : memref<2x36x4xf32, #tpu.memory_space<vmem>>, vector<2x2x4xf32>
    %cst_83 = arith.constant dense<0xFF800000> : vector<2x4xf32>
    %88 = vector.multi_reduction <maximumf>, %87, %cst_83 [1] : vector<2x2x4xf32> to vector<2x4xf32>
    %c0_84 = arith.constant 0 : index
    %c8 = arith.constant 8 : index
    %c0_85 = arith.constant 0 : index
    %89 = vector.load %arg13[%c0_84, %c8, %c0_85] : memref<2x36x4xf32, #tpu.memory_space<vmem>>, vector<2x2x4xf32>
    %cst_86 = arith.constant dense<0xFF800000> : vector<2x4xf32>
    %90 = vector.multi_reduction <maximumf>, %89, %cst_86 [1] : vector<2x2x4xf32> to vector<2x4xf32>
    %c0_87 = arith.constant 0 : index
    %c10 = arith.constant 10 : index
    %c0_88 = arith.constant 0 : index
    %91 = vector.load %arg13[%c0_87, %c10, %c0_88] : memref<2x36x4xf32, #tpu.memory_space<vmem>>, vector<2x2x4xf32>
    %cst_89 = arith.constant dense<0xFF800000> : vector<2x4xf32>
    %92 = vector.multi_reduction <maximumf>, %91, %cst_89 [1] : vector<2x2x4xf32> to vector<2x4xf32>
    %c0_90 = arith.constant 0 : index
    %c12 = arith.constant 12 : index
    %c0_91 = arith.constant 0 : index
    %93 = vector.load %arg13[%c0_90, %c12, %c0_91] : memref<2x36x4xf32, #tpu.memory_space<vmem>>, vector<2x2x4xf32>
    %cst_92 = arith.constant dense<0xFF800000> : vector<2x4xf32>
    %94 = vector.multi_reduction <maximumf>, %93, %cst_92 [1] : vector<2x2x4xf32> to vector<2x4xf32>
    %c0_93 = arith.constant 0 : index
    %c14 = arith.constant 14 : index
    %c0_94 = arith.constant 0 : index
    %95 = vector.load %arg13[%c0_93, %c14, %c0_94] : memref<2x36x4xf32, #tpu.memory_space<vmem>>, vector<2x2x4xf32>
    %cst_95 = arith.constant dense<0xFF800000> : vector<2x4xf32>
    %96 = vector.multi_reduction <maximumf>, %95, %cst_95 [1] : vector<2x2x4xf32> to vector<2x4xf32>
    %97 = tpu.concatenate %82, %84, %86, %88, %90, %92, %94, %96 in 1 : vector<2x4xf32>, vector<2x4xf32>, vector<2x4xf32>, vector<2x4xf32>, vector<2x4xf32>, vector<2x4xf32>, vector<2x4xf32>, vector<2x4xf32> -> vector<2x32xf32>
    %c0_96 = arith.constant 0 : index
    %c0_97 = arith.constant 0 : index
    %98 = vector.load %arg6[%c0_96, %c0_97] : memref<32x32xf32, #tpu.memory_space<vmem>>, vector<32x32xf32>
    %cst_98 = arith.constant dense<0.000000e+00> : vector<2x32xf32>
    %99 = tpu.matmul %97, %98, %cst_98 {dimension_numbers = #tpu.dot_dimension_numbers<[1], [0], [0], [1], [0, 0, 1, 1], [], []>} : vector<2x32xf32>, vector<32x32xf32>, vector<2x32xf32> -> vector<2x32xf32>
    %c0_99 = arith.constant 0 : index
    %c0_100 = arith.constant 0 : index
    %100 = vector.load %arg7[%c0_99, %c0_100] : memref<1x32xf32, #tpu.memory_space<vmem>>, vector<1x32xf32>
    %101 = vector.broadcast %100 : vector<1x32xf32> to vector<2x32xf32>
    %102 = arith.addf %99, %101 : vector<2x32xf32>
    %cst_101 = arith.constant 0.000000e+00 : f32
    %103 = vector.broadcast %cst_101 : f32 to vector<2x32xf32>
    %104 = arith.maximumf %102, %103 : vector<2x32xf32>
    %c0_102 = arith.constant 0 : index
    %c0_103 = arith.constant 0 : index
    %105 = vector.load %arg8[%c0_102, %c0_103] : memref<32x32xf32, #tpu.memory_space<vmem>>, vector<32x32xf32>
    %cst_104 = arith.constant dense<0.000000e+00> : vector<2x32xf32>
    %106 = tpu.matmul %104, %105, %cst_104 {dimension_numbers = #tpu.dot_dimension_numbers<[1], [0], [0], [1], [0, 0, 1, 1], [], []>} : vector<2x32xf32>, vector<32x32xf32>, vector<2x32xf32> -> vector<2x32xf32>
    %c0_105 = arith.constant 0 : index
    %c0_106 = arith.constant 0 : index
    %107 = vector.load %arg9[%c0_105, %c0_106] : memref<1x32xf32, #tpu.memory_space<vmem>>, vector<1x32xf32>
    %108 = vector.broadcast %107 : vector<1x32xf32> to vector<2x32xf32>
    %109 = arith.addf %106, %108 : vector<2x32xf32>
    %cst_107 = arith.constant 0.000000e+00 : f32
    %110 = vector.broadcast %cst_107 : f32 to vector<2x32xf32>
    %111 = arith.maximumf %109, %110 : vector<2x32xf32>
    %c0_108 = arith.constant 0 : index
    %c0_109 = arith.constant 0 : index
    %112 = vector.load %arg10[%c0_108, %c0_109] : memref<32x1xf32, #tpu.memory_space<vmem>>, vector<32x1xf32>
    %cst_110 = arith.constant dense<0.000000e+00> : vector<2x1xf32>
    %113 = tpu.matmul %111, %112, %cst_110 {dimension_numbers = #tpu.dot_dimension_numbers<[1], [0], [0], [1], [0, 0, 1, 1], [], []>} : vector<2x32xf32>, vector<32x1xf32>, vector<2x1xf32> -> vector<2x1xf32>
    %c0_111 = arith.constant 0 : index
    %c0_112 = arith.constant 0 : index
    %114 = vector.load %arg11[%c0_111, %c0_112] : memref<1x1xf32, #tpu.memory_space<vmem>>, vector<1x1xf32>
    %115 = vector.broadcast %114 : vector<1x1xf32> to vector<2x1xf32>
    %116 = arith.addf %113, %115 : vector<2x1xf32>
    %c0_113 = arith.constant 0 : index
    %c0_114 = arith.constant 0 : index
    %117 = vector.load %arg12[%c0_113, %c0_114] : memref<2x1xf32, #tpu.memory_space<vmem>>, vector<2x1xf32>
    tpu.vector_store %arg12[%c0_113, %c0_114], %116 {strides = array<i32>} : memref<2x1xf32, #tpu.memory_space<vmem>>, vector<2x1xf32>,
    return
  }
  func.func @transform_0(%arg0: i32) -> (i32, i32, i32) {
    %c0_i32 = arith.constant 0 : i32
    %c0_i32_0 = arith.constant 0 : i32
    %c0_i32_1 = arith.constant 0 : i32
    return %arg0, %c0_i32, %c0_i32_0 : i32, i32, i32
  }
  func.func @transform_1(%arg0: i32) -> (i32, i32) {
    %c0_i32 = arith.constant 0 : i32
    %c0_i32_0 = arith.constant 0 : i32
    %c0_i32_1 = arith.constant 0 : i32
    return %c0_i32, %c0_i32_0 : i32, i32
  }
  func.func @transform_2(%arg0: i32) -> (i32, i32) {
    %c0_i32 = arith.constant 0 : i32
    %c0_i32_0 = arith.constant 0 : i32
    %c0_i32_1 = arith.constant 0 : i32
    return %c0_i32, %c0_i32_0 : i32, i32
  }
  func.func @transform_3(%arg0: i32) -> (i32, i32) {
    %c0_i32 = arith.constant 0 : i32
    %c0_i32_0 = arith.constant 0 : i32
    %c0_i32_1 = arith.constant 0 : i32
    return %c0_i32, %c0_i32_0 : i32, i32
  }
  func.func @transform_4(%arg0: i32) -> (i32, i32) {
    %c0_i32 = arith.constant 0 : i32
    %c0_i32_0 = arith.constant 0 : i32
    %c0_i32_1 = arith.constant 0 : i32
    return %c0_i32, %c0_i32_0 : i32, i32
  }
  func.func @transform_5(%arg0: i32) -> (i32, i32) {
    %c0_i32 = arith.constant 0 : i32
    %c0_i32_0 = arith.constant 0 : i32
    %c0_i32_1 = arith.constant 0 : i32
    return %c0_i32, %c0_i32_0 : i32, i32
  }
  func.func @transform_6(%arg0: i32) -> (i32, i32) {
    %c0_i32 = arith.constant 0 : i32
    %c0_i32_0 = arith.constant 0 : i32
    %c0_i32_1 = arith.constant 0 : i32
    return %c0_i32, %c0_i32_0 : i32, i32
  }
  func.func @transform_7(%arg0: i32) -> (i32, i32) {
    %c0_i32 = arith.constant 0 : i32
    %c0_i32_0 = arith.constant 0 : i32
    %c0_i32_1 = arith.constant 0 : i32
    return %c0_i32, %c0_i32_0 : i32, i32
  }
  func.func @transform_8(%arg0: i32) -> (i32, i32) {
    %c0_i32 = arith.constant 0 : i32
    %c0_i32_0 = arith.constant 0 : i32
    %c0_i32_1 = arith.constant 0 : i32
    return %c0_i32, %c0_i32_0 : i32, i32
  }
  func.func @transform_9(%arg0: i32) -> (i32, i32) {
    %c0_i32 = arith.constant 0 : i32
    %c0_i32_0 = arith.constant 0 : i32
    %c0_i32_1 = arith.constant 0 : i32
    return %c0_i32, %c0_i32_0 : i32, i32
  }
  func.func @transform_10(%arg0: i32) -> (i32, i32) {
    %c0_i32 = arith.constant 0 : i32
    %c0_i32_0 = arith.constant 0 : i32
    %c0_i32_1 = arith.constant 0 : i32
    return %c0_i32, %c0_i32_0 : i32, i32
  }
  func.func @transform_11(%arg0: i32) -> (i32, i32) {
    %c0_i32 = arith.constant 0 : i32
    %c0_i32_0 = arith.constant 0 : i32
    return %arg0, %c0_i32 : i32, i32
  }
}

</mosaic_0001>

<llo_original>
// kernel: tpu_custom_call.1
$region0: #{tpu_custom_call.1}
  #allocation0 [shape = 'u32[]', space=smem, size = 0x4, offset = 0x4, fixed_abs, tag = 'smem constant byte address 0x4 - core index']
  #allocation1 [shape = 'u32[72,128]{1,0:T(1,128)}', space=vmem, size = 0x9000, scoped, tag = 'internal scratch']
  #allocation2 [shape = 'f32[2,36,4]{2,1,0:T(8,128)}', space=vmem, size = 0xa000, scoped, tag = 'scratch operand']
  #allocation3 [shape = 'f32[1,1]{1,0:T(1,128)S(1)}', space=vmem, size = 0x200, scoped, tag = 'scoped memory for tpu_custom_call.1']
  %s0 = inlined_call_operand.vmem [shape: f32[2,38,1], index: 0, kind: input, shape index: {}]
  %s1 = inlined_call_operand.vmem [shape: f32[7,4], index: 1, kind: input, shape index: {}]
  %s2 = inlined_call_operand.vmem [shape: f32[1,4], index: 2, kind: input, shape index: {}]
  %s3 = inlined_call_operand.vmem [shape: f32[12,4], index: 3, kind: input, shape index: {}]
  %s4 = inlined_call_operand.vmem [shape: f32[1,4], index: 4, kind: input, shape index: {}]
  %s5 = inlined_call_operand.vmem [shape: f32[32,32], index: 5, kind: input, shape index: {}]
  %s6 = inlined_call_operand.vmem [shape: f32[1,32], index: 6, kind: input, shape index: {}]
  %s7 = inlined_call_operand.vmem [shape: f32[32,32], index: 7, kind: input, shape index: {}]
  %s8 = inlined_call_operand.vmem [shape: f32[1,32], index: 8, kind: input, shape index: {}]
  %s9 = inlined_call_operand.vmem [shape: f32[32,1], index: 9, kind: input, shape index: {}]
  %s10 = inlined_call_operand.<no memory space> [shape: f32[1,1], index: 10, kind: input, shape index: {}]
  %s11 = inlined_call_operand.vmem [shape: f32[2,1], index: 11, kind: output, shape index: {}]
  %s12 = sld [smem:[#allocation0]]
  $region54: #{tpu_custom_call.1} parent=0
    _
  %s14 = ssub.s32 1, %s12
  %s15 = scalar_select 0, %s14, %s12
  %v16 = vstv %s10
  %17 = vst [vmem:[#allocation3] sm:$0x1] %v16
  // Predicated region
  $region2: #{tpu_custom_call.1} parent=0 // pred_check
    _
  $region3: #{tpu_custom_call.1} parent=0 // pred_check_branch
    %19 = sbr.rel (0) target = $region5
  $region4: #{tpu_custom_call.1} parent=0 // pred_region
    _
  $region5: #{tpu_custom_call.1} parent=0 // pred_fallthru
    _
  // Predicated region
  $region6: #{tpu_custom_call.1} parent=0 // pred_check
    _
  $region7: #{tpu_custom_call.1} parent=0 // pred_check_branch
    %21 = sbr.rel (0) target = $region9
  $region8: #{tpu_custom_call.1} parent=0 // pred_region
    _
  $region9: #{tpu_custom_call.1} parent=0 // pred_fallthru
    _
  // Predicated region
  $region10: #{tpu_custom_call.1} parent=0 // pred_check
    _
  $region11: #{tpu_custom_call.1} parent=0 // pred_check_branch
    %23 = sbr.rel (0) target = $region13
  $region12: #{tpu_custom_call.1} parent=0 // pred_region
    _
  $region13: #{tpu_custom_call.1} parent=0 // pred_fallthru
    _
  // Predicated region
  $region14: #{tpu_custom_call.1} parent=0 // pred_check
    _
  $region15: #{tpu_custom_call.1} parent=0 // pred_check_branch
    %25 = sbr.rel (0) target = $region17
  $region16: #{tpu_custom_call.1} parent=0 // pred_region
    _
  $region17: #{tpu_custom_call.1} parent=0 // pred_fallthru
    _
  // Predicated region
  $region18: #{tpu_custom_call.1} parent=0 // pred_check
    _
  $region19: #{tpu_custom_call.1} parent=0 // pred_check_branch
    %27 = sbr.rel (0) target = $region21
  $region20: #{tpu_custom_call.1} parent=0 // pred_region
    _
  $region21: #{tpu_custom_call.1} parent=0 // pred_fallthru
    _
  // Predicated region
  $region22: #{tpu_custom_call.1} parent=0 // pred_check
    _
  $region23: #{tpu_custom_call.1} parent=0 // pred_check_branch
    %29 = sbr.rel (0) target = $region25
  $region24: #{tpu_custom_call.1} parent=0 // pred_region
    _
  $region25: #{tpu_custom_call.1} parent=0 // pred_fallthru
    _
  // Predicated region
  $region26: #{tpu_custom_call.1} parent=0 // pred_check
    _
  $region27: #{tpu_custom_call.1} parent=0 // pred_check_branch
    %31 = sbr.rel (0) target = $region29
  $region28: #{tpu_custom_call.1} parent=0 // pred_region
    _
  $region29: #{tpu_custom_call.1} parent=0 // pred_fallthru
    _
  // Predicated region
  $region30: #{tpu_custom_call.1} parent=0 // pred_check
    _
  $region31: #{tpu_custom_call.1} parent=0 // pred_check_branch
    %33 = sbr.rel (0) target = $region33
  $region32: #{tpu_custom_call.1} parent=0 // pred_region
    _
  $region33: #{tpu_custom_call.1} parent=0 // pred_fallthru
    _
  // Predicated region
  $region34: #{tpu_custom_call.1} parent=0 // pred_check
    _
  $region35: #{tpu_custom_call.1} parent=0 // pred_check_branch
    %35 = sbr.rel (0) target = $region37
  $region36: #{tpu_custom_call.1} parent=0 // pred_region
    _
  $region37: #{tpu_custom_call.1} parent=0 // pred_fallthru
    _
  // Predicated region
  $region38: #{tpu_custom_call.1} parent=0 // pred_check
    _
  $region39: #{tpu_custom_call.1} parent=0 // pred_check_branch
    %37 = sbr.rel (0) target = $region41
  $region40: #{tpu_custom_call.1} parent=0 // pred_region
    _
  $region41: #{tpu_custom_call.1} parent=0 // pred_fallthru
    _
  // Predicated region
  $region42: #{tpu_custom_call.1} parent=0 // pred_check
    _
  $region43: #{tpu_custom_call.1} parent=0 // pred_check_branch
    %39 = sbr.rel (0) target = $region45
  $region44: #{tpu_custom_call.1} parent=0 // pred_region
    _
  $region45: #{tpu_custom_call.1} parent=0 // pred_fallthru
    _
  %v40 = vld [vmem:[%s0] sm:$0xff]
  %v41 = vld [vmem:[%s0 + $0x8] sm:$0xff]
  %v42 = vld [vmem:[%s0 + $0x10] sm:$0xff]
  %v43 = vld [vmem:[%s0 + $0x18] sm:$0xff]
  %v44 = vld [vmem:[%s0 + $0x28] sm:$0xff]
  %v45 = vld [vmem:[%s0 + $0x30] sm:$0xff]
  %v46 = vld [vmem:[%s0 + $0x38] sm:$0xff]
  %v47 = vld [vmem:[%s0 + $0x40] sm:$0xff]
  %v48 = vld [vmem:[%s1] sm:$0x1]
  %50 = vset.pattern.permute.xlu0 0
  %51 = vperm.xlu0 %50, %v40
  %v52 = vpop.permute.xlu0 %51
  %55 = vset.pattern.permute.xlu0 0
  %56 = vperm.xlu0 %55, %v41
  %v57 = vpop.permute.xlu0 %56
  %60 = vset.pattern.permute.xlu0 0
  %61 = vperm.xlu0 %60, %v42
  %v62 = vpop.permute.xlu0 %61
  %65 = vset.pattern.permute.xlu0 0
  %66 = vperm.xlu0 %65, %v43
  %v67 = vpop.permute.xlu0 %66
  %70 = vset.pattern.permute.xlu0 0
  %71 = vperm.xlu0 %70, %v44
  %v72 = vpop.permute.xlu0 %71
  %75 = vset.pattern.permute.xlu0 0
  %76 = vperm.xlu0 %75, %v45
  %v77 = vpop.permute.xlu0 %76
  %80 = vset.pattern.permute.xlu0 0
  %81 = vperm.xlu0 %80, %v46
  %v82 = vpop.permute.xlu0 %81
  %85 = vset.pattern.permute.xlu0 0
  %86 = vperm.xlu0 %85, %v47
  %v87 = vpop.permute.xlu0 %86
  %v89 = vperm.slane %v48, 0
  %v90 = vmul.f32 %v52, %v89
  %v91 = vmul.f32 %v57, %v89
  %v92 = vmul.f32 %v62, %v89
  %v93 = vmul.f32 %v67, %v89
  %v94 = vmul.f32 %v72, %v89
  %v95 = vmul.f32 %v77, %v89
  %v96 = vmul.f32 %v82, %v89
  %v97 = vmul.f32 %v87, %v89
  %v98 = vadd.f32 %v90, 0.0
  %v99 = vadd.f32 %v91, 0.0
  %v100 = vadd.f32 %v92, 0.0
  %v101 = vadd.f32 %v93, 0.0
  %v102 = vadd.f32 %v94, 0.0
  %v103 = vadd.f32 %v95, 0.0
  %v104 = vadd.f32 %v96, 0.0
  %v105 = vadd.f32 %v97, 0.0
  %v106 = vld [vmem:[%s0 + $0x1] sm:$0xff]
  %v107 = vld [vmem:[%s0 + $0x9] sm:$0xff]
  %v108 = vld [vmem:[%s0 + $0x11] sm:$0xff]
  %v109 = vld [vmem:[%s0 + $0x19] sm:$0xff]
  %v110 = vld [vmem:[%s0 + $0x29] sm:$0xff]
  %v111 = vld [vmem:[%s0 + $0x31] sm:$0xff]
  %v112 = vld [vmem:[%s0 + $0x39] sm:$0xff]
  %v113 = vld [vmem:[%s0 + $0x41] sm:$0xff]
  %v114 = vld [vmem:[%s1 + $0x1] sm:$0x1]
  %116 = vset.pattern.permute.xlu0 0
  %117 = vperm.xlu0 %116, %v106
  %v118 = vpop.permute.xlu0 %117
  %121 = vset.pattern.permute.xlu0 0
  %122 = vperm.xlu0 %121, %v107
  %v123 = vpop.permute.xlu0 %122
  %126 = vset.pattern.permute.xlu0 0
  %127 = vperm.xlu0 %126, %v108
  %v128 = vpop.permute.xlu0 %127
  %131 = vset.pattern.permute.xlu0 0
  %132 = vperm.xlu0 %131, %v109
  %v133 = vpop.permute.xlu0 %132
  %136 = vset.pattern.permute.xlu0 0
  %137 = vperm.xlu0 %136, %v110
  %v138 = vpop.permute.xlu0 %137
  %141 = vset.pattern.permute.xlu0 0
  %142 = vperm.xlu0 %141, %v111
  %v143 = vpop.permute.xlu0 %142
  %146 = vset.pattern.permute.xlu0 0
  %147 = vperm.xlu0 %146, %v112
  %v148 = vpop.permute.xlu0 %147
  %151 = vset.pattern.permute.xlu0 0
  %152 = vperm.xlu0 %151, %v113
  %v153 = vpop.permute.xlu0 %152
  %v155 = vperm.slane %v114, 0
  %v156 = vmul.f32 %v118, %v155
  %v157 = vmul.f32 %v123, %v155
  %v158 = vmul.f32 %v128, %v155
  %v159 = vmul.f32 %v133, %v155
  %v160 = vmul.f32 %v138, %v155
  %v161 = vmul.f32 %v143, %v155
  %v162 = vmul.f32 %v148, %v155
  %v163 = vmul.f32 %v153, %v155
  %v164 = vadd.f32 %v98, %v156
  %v165 = vadd.f32 %v99, %v157
  %v166 = vadd.f32 %v100, %v158
  %v167 = vadd.f32 %v101, %v159
  %v168 = vadd.f32 %v102, %v160
  %v169 = vadd.f32 %v103, %v161
  %v170 = vadd.f32 %v104, %v162
  %v171 = vadd.f32 %v105, %v163
  %v172 = vld [vmem:[%s0 + $0x2] sm:$0xff]
  %v173 = vld [vmem:[%s0 + $0xa] sm:$0xff]
  %v174 = vld [vmem:[%s0 + $0x12] sm:$0xff]
  %v175 = vld [vmem:[%s0 + $0x1a] sm:$0xff]
  %v176 = vld [vmem:[%s0 + $0x2a] sm:$0xff]
  %v177 = vld [vmem:[%s0 + $0x32] sm:$0xff]
  %v178 = vld [vmem:[%s0 + $0x3a] sm:$0xff]
  %v179 = vld [vmem:[%s0 + $0x42] sm:$0xff]
  %v180 = vld [vmem:[%s1 + $0x2] sm:$0x1]
  %182 = vset.pattern.permute.xlu0 0
  %183 = vperm.xlu0 %182, %v172
  %v184 = vpop.permute.xlu0 %183
  %187 = vset.pattern.permute.xlu0 0
  %188 = vperm.xlu0 %187, %v173
  %v189 = vpop.permute.xlu0 %188
  %192 = vset.pattern.permute.xlu0 0
  %193 = vperm.xlu0 %192, %v174
  %v194 = vpop.permute.xlu0 %193
  %197 = vset.pattern.permute.xlu0 0
  %198 = vperm.xlu0 %197, %v175
  %v199 = vpop.permute.xlu0 %198
  %202 = vset.pattern.permute.xlu0 0
  %203 = vperm.xlu0 %202, %v176
  %v204 = vpop.permute.xlu0 %203
  %207 = vset.pattern.permute.xlu0 0
  %208 = vperm.xlu0 %207, %v177
  %v209 = vpop.permute.xlu0 %208
  %212 = vset.pattern.permute.xlu0 0
  %213 = vperm.xlu0 %212, %v178
  %v214 = vpop.permute.xlu0 %213
  %217 = vset.pattern.permute.xlu0 0
  %218 = vperm.xlu0 %217, %v179
  %v219 = vpop.permute.xlu0 %218
  %v221 = vperm.slane %v180, 0
  %v222 = vmul.f32 %v184, %v221
  %v223 = vmul.f32 %v189, %v221
  %v224 = vmul.f32 %v194, %v221
  %v225 = vmul.f32 %v199, %v221
  %v226 = vmul.f32 %v204, %v221
  %v227 = vmul.f32 %v209, %v221
  %v228 = vmul.f32 %v214, %v221
  %v229 = vmul.f32 %v219, %v221
  %v230 = vadd.f32 %v164, %v222
  %v231 = vadd.f32 %v165, %v223
  %v232 = vadd.f32 %v166, %v224
  %v233 = vadd.f32 %v167, %v225
  %v234 = vadd.f32 %v168, %v226
  %v235 = vadd.f32 %v169, %v227
  %v236 = vadd.f32 %v170, %v228
  %v237 = vadd.f32 %v171, %v229
  %v238 = vld [vmem:[%s0 + $0x3] sm:$0xff]
  %v239 = vld [vmem:[%s0 + $0xb] sm:$0xff]
  %v240 = vld [vmem:[%s0 + $0x13] sm:$0xff]
  %v241 = vld [vmem:[%s0 + $0x1b] sm:$0xff]
  %v242 = vld [vmem:[%s0 + $0x2b] sm:$0xff]
  %v243 = vld [vmem:[%s0 + $0x33] sm:$0xff]
  %v244 = vld [vmem:[%s0 + $0x3b] sm:$0xff]
  %v245 = vld [vmem:[%s0 + $0x43] sm:$0xff]
  %v246 = vld [vmem:[%s1 + $0x3] sm:$0x1]
  %248 = vset.pattern.permute.xlu0 0
  %249 = vperm.xlu0 %248, %v238
  %v250 = vpop.permute.xlu0 %249
  %253 = vset.pattern.permute.xlu0 0
  %254 = vperm.xlu0 %253, %v239
  %v255 = vpop.permute.xlu0 %254
  %258 = vset.pattern.permute.xlu0 0
  %259 = vperm.xlu0 %258, %v240
  %v260 = vpop.permute.xlu0 %259
  %263 = vset.pattern.permute.xlu0 0
  %264 = vperm.xlu0 %263, %v241
  %v265 = vpop.permute.xlu0 %264
  %268 = vset.pattern.permute.xlu0 0
  %269 = vperm.xlu0 %268, %v242
  %v270 = vpop.permute.xlu0 %269
  %273 = vset.pattern.permute.xlu0 0
  %274 = vperm.xlu0 %273, %v243
  %v275 = vpop.permute.xlu0 %274
  %278 = vset.pattern.permute.xlu0 0
  %279 = vperm.xlu0 %278, %v244
  %v280 = vpop.permute.xlu0 %279
  %283 = vset.pattern.permute.xlu0 0
  %284 = vperm.xlu0 %283, %v245
  %v285 = vpop.permute.xlu0 %284
  %v287 = vperm.slane %v246, 0
  %v288 = vmul.f32 %v250, %v287
  %v289 = vmul.f32 %v255, %v287
  %v290 = vmul.f32 %v260, %v287
  %v291 = vmul.f32 %v265, %v287
  %v292 = vmul.f32 %v270, %v287
  %v293 = vmul.f32 %v275, %v287
  %v294 = vmul.f32 %v280, %v287
  %v295 = vmul.f32 %v285, %v287
  %v296 = vadd.f32 %v230, %v288
  %v297 = vadd.f32 %v231, %v289
  %v298 = vadd.f32 %v232, %v290
  %v299 = vadd.f32 %v233, %v291
  %v300 = vadd.f32 %v234, %v292
  %v301 = vadd.f32 %v235, %v293
  %v302 = vadd.f32 %v236, %v294
  %v303 = vadd.f32 %v237, %v295
  %v304 = vld [vmem:[%s0 + $0x4] sm:$0xff]
  %v305 = vld [vmem:[%s0 + $0xc] sm:$0xff]
  %v306 = vld [vmem:[%s0 + $0x14] sm:$0xff]
  %v307 = vld [vmem:[%s0 + $0x1c] sm:$0xff]
  %v308 = vld [vmem:[%s0 + $0x2c] sm:$0xff]
  %v309 = vld [vmem:[%s0 + $0x34] sm:$0xff]
  %v310 = vld [vmem:[%s0 + $0x3c] sm:$0xff]
  %v311 = vld [vmem:[%s0 + $0x44] sm:$0xff]
  %v312 = vld [vmem:[%s1 + $0x4] sm:$0x1]
  %314 = vset.pattern.permute.xlu0 0
  %315 = vperm.xlu0 %314, %v304
  %v316 = vpop.permute.xlu0 %315
  %319 = vset.pattern.permute.xlu0 0
  %320 = vperm.xlu0 %319, %v305
  %v321 = vpop.permute.xlu0 %320
  %324 = vset.pattern.permute.xlu0 0
  %325 = vperm.xlu0 %324, %v306
  %v326 = vpop.permute.xlu0 %325
  %329 = vset.pattern.permute.xlu0 0
  %330 = vperm.xlu0 %329, %v307
  %v331 = vpop.permute.xlu0 %330
  %334 = vset.pattern.permute.xlu0 0
  %335 = vperm.xlu0 %334, %v308
  %v336 = vpop.permute.xlu0 %335
  %339 = vset.pattern.permute.xlu0 0
  %340 = vperm.xlu0 %339, %v309
  %v341 = vpop.permute.xlu0 %340
  %344 = vset.pattern.permute.xlu0 0
  %345 = vperm.xlu0 %344, %v310
  %v346 = vpop.permute.xlu0 %345
  %349 = vset.pattern.permute.xlu0 0
  %350 = vperm.xlu0 %349, %v311
  %v351 = vpop.permute.xlu0 %350
  %v353 = vperm.slane %v312, 0
  %v354 = vmul.f32 %v316, %v353
  %v355 = vmul.f32 %v321, %v353
  %v356 = vmul.f32 %v326, %v353
  %v357 = vmul.f32 %v331, %v353
  %v358 = vmul.f32 %v336, %v353
  %v359 = vmul.f32 %v341, %v353
  %v360 = vmul.f32 %v346, %v353
  %v361 = vmul.f32 %v351, %v353
  %v362 = vadd.f32 %v296, %v354
  %v363 = vadd.f32 %v297, %v355
  %v364 = vadd.f32 %v298, %v356
  %v365 = vadd.f32 %v299, %v357
  %v366 = vadd.f32 %v300, %v358
  %v367 = vadd.f32 %v301, %v359
  %v368 = vadd.f32 %v302, %v360
  %v369 = vadd.f32 %v303, %v361
  %v370 = vld [vmem:[%s0 + $0x5] sm:$0xff]
  %v371 = vld [vmem:[%s0 + $0xd] sm:$0xff]
  %v372 = vld [vmem:[%s0 + $0x15] sm:$0xff]
  %v373 = vld [vmem:[%s0 + $0x1d] sm:$0xff]
  %v374 = vld [vmem:[%s0 + $0x2d] sm:$0xff]
  %v375 = vld [vmem:[%s0 + $0x35] sm:$0xff]
  %v376 = vld [vmem:[%s0 + $0x3d] sm:$0xff]
  %v377 = vld [vmem:[%s0 + $0x45] sm:$0xff]
  %v378 = vld [vmem:[%s1 + $0x5] sm:$0x1]
  %380 = vset.pattern.permute.xlu0 0
  %381 = vperm.xlu0 %380, %v370
  %v382 = vpop.permute.xlu0 %381
  %385 = vset.pattern.permute.xlu0 0
  %386 = vperm.xlu0 %385, %v371
  %v387 = vpop.permute.xlu0 %386
  %390 = vset.pattern.permute.xlu0 0
  %391 = vperm.xlu0 %390, %v372
  %v392 = vpop.permute.xlu0 %391
  %395 = vset.pattern.permute.xlu0 0
  %396 = vperm.xlu0 %395, %v373
  %v397 = vpop.permute.xlu0 %396
  %400 = vset.pattern.permute.xlu0 0
  %401 = vperm.xlu0 %400, %v374
  %v402 = vpop.permute.xlu0 %401
  %405 = vset.pattern.permute.xlu0 0
  %406 = vperm.xlu0 %405, %v375
  %v407 = vpop.permute.xlu0 %406
  %410 = vset.pattern.permute.xlu0 0
  %411 = vperm.xlu0 %410, %v376
  %v412 = vpop.permute.xlu0 %411
  %415 = vset.pattern.permute.xlu0 0
  %416 = vperm.xlu0 %415, %v377
  %v417 = vpop.permute.xlu0 %416
  %v419 = vperm.slane %v378, 0
  %v420 = vmul.f32 %v382, %v419
  %v421 = vmul.f32 %v387, %v419
  %v422 = vmul.f32 %v392, %v419
  %v423 = vmul.f32 %v397, %v419
  %v424 = vmul.f32 %v402, %v419
  %v425 = vmul.f32 %v407, %v419
  %v426 = vmul.f32 %v412, %v419
  %v427 = vmul.f32 %v417, %v419
  %v428 = vadd.f32 %v362, %v420
  %v429 = vadd.f32 %v363, %v421
  %v430 = vadd.f32 %v364, %v422
  %v431 = vadd.f32 %v365, %v423
  %v432 = vadd.f32 %v366, %v424
  %v433 = vadd.f32 %v367, %v425
  %v434 = vadd.f32 %v368, %v426
  %v435 = vadd.f32 %v369, %v427
  %v436 = vld [vmem:[%s0 + $0x6] sm:$0xff]
  %v437 = vld [vmem:[%s0 + $0xe] sm:$0xff]
  %v438 = vld [vmem:[%s0 + $0x16] sm:$0xff]
  %v439 = vld [vmem:[%s0 + $0x1e] sm:$0xff]
  %v440 = vld [vmem:[%s0 + $0x2e] sm:$0xff]
  %v441 = vld [vmem:[%s0 + $0x36] sm:$0xff]
  %v442 = vld [vmem:[%s0 + $0x3e] sm:$0xff]
  %v443 = vld [vmem:[%s0 + $0x46] sm:$0xff]
  %v444 = vld [vmem:[%s1 + $0x6] sm:$0x1]
  %446 = vset.pattern.permute.xlu0 0
  %447 = vperm.xlu0 %446, %v436
  %v448 = vpop.permute.xlu0 %447
  %451 = vset.pattern.permute.xlu0 0
  %452 = vperm.xlu0 %451, %v437
  %v453 = vpop.permute.xlu0 %452
  %456 = vset.pattern.permute.xlu0 0
  %457 = vperm.xlu0 %456, %v438
  %v458 = vpop.permute.xlu0 %457
  %461 = vset.pattern.permute.xlu0 0
  %462 = vperm.xlu0 %461, %v439
  %v463 = vpop.permute.xlu0 %462
  %466 = vset.pattern.permute.xlu0 0
  %467 = vperm.xlu0 %466, %v440
  %v468 = vpop.permute.xlu0 %467
  %471 = vset.pattern.permute.xlu0 0
  %472 = vperm.xlu0 %471, %v441
  %v473 = vpop.permute.xlu0 %472
  %476 = vset.pattern.permute.xlu0 0
  %477 = vperm.xlu0 %476, %v442
  %v478 = vpop.permute.xlu0 %477
  %481 = vset.pattern.permute.xlu0 0
  %482 = vperm.xlu0 %481, %v443
  %v483 = vpop.permute.xlu0 %482
  %v485 = vperm.slane %v444, 0
  %v486 = vmul.f32 %v448, %v485
  %v487 = vmul.f32 %v453, %v485
  %v488 = vmul.f32 %v458, %v485
  %v489 = vmul.f32 %v463, %v485
  %v490 = vmul.f32 %v468, %v485
  %v491 = vmul.f32 %v473, %v485
  %v492 = vmul.f32 %v478, %v485
  %v493 = vmul.f32 %v483, %v485
  %v494 = vadd.f32 %v428, %v486
  %v495 = vadd.f32 %v429, %v487
  %v496 = vadd.f32 %v430, %v488
  %v497 = vadd.f32 %v431, %v489
  %v498 = vadd.f32 %v432, %v490
  %v499 = vadd.f32 %v433, %v491
  %v500 = vadd.f32 %v434, %v492
  %v501 = vadd.f32 %v435, %v493
  %v502 = vld [vmem:[%s2] sm:$0x1]
  %v504 = vperm.slane %v502, 0
  %v506 = vadd.f32 %v494, %v504
  %v507 = vadd.f32 %v495, %v504
  %v508 = vadd.f32 %v496, %v504
  %v509 = vadd.f32 %v497, %v504
  %v510 = vadd.f32 %v498, %v504
  %v511 = vadd.f32 %v499, %v504
  %v512 = vadd.f32 %v500, %v504
  %v513 = vadd.f32 %v501, %v504
  %v514 = vmax.f32 %v506, 0.0
  %v515 = vmax.f32 %v507, 0.0
  %v516 = vmax.f32 %v508, 0.0
  %v517 = vmax.f32 %v509, 0.0
  %v518 = vmax.f32 %v510, 0.0
  %v519 = vmax.f32 %v511, 0.0
  %v520 = vmax.f32 %v512, 0.0
  %v521 = vmax.f32 %v513, 0.0
  %vm522 = vcmask 25600
  %523 = vst.msk [vmem:[#allocation2] sm:$0x3] %vm522, 0.0
  %524 = vst.msk [vmem:[#allocation2 + $0x28] sm:$0x3] %vm522, 0.0
  %vm525 = vcmask 31744
  %526 = vst.msk [vmem:[#allocation2 + $0x2] sm:$0xff] %vm525, %v514
  %527 = vst.msk [vmem:[#allocation2 + $0xa] sm:$0xff] %vm525, %v515
  %528 = vst.msk [vmem:[#allocation2 + $0x12] sm:$0xff] %vm525, %v516
  %529 = vst.msk [vmem:[#allocation2 + $0x1a] sm:$0xff] %vm525, %v517
  %530 = vst.msk [vmem:[#allocation2 + $0x2a] sm:$0xff] %vm525, %v518
  %531 = vst.msk [vmem:[#allocation2 + $0x32] sm:$0xff] %vm525, %v519
  %532 = vst.msk [vmem:[#allocation2 + $0x3a] sm:$0xff] %vm525, %v520
  %533 = vst.msk [vmem:[#allocation2 + $0x42] sm:$0xff] %vm525, %v521
  %534 = vst.msk [vmem:[#allocation2 + $0x22] sm:$0x3] %vm522, 0.0
  %535 = vst.msk [vmem:[#allocation2 + $0x4a] sm:$0x3] %vm522, 0.0
  %v536 = vld [vmem:[#allocation2] ss:$2 sm:$0xff]
  %s537 = scalar_lea.vmem [#allocation2], 16
  %v538 = vld [vmem:[%s537] ss:$2 sm:$0xff]
  %s539 = scalar_lea.vmem [#allocation2], 40
  %v540 = vld [vmem:[%s539] ss:$2 sm:$0xff]
  %s541 = scalar_lea.vmem [#allocation2], 56
  %v542 = vld [vmem:[%s541] ss:$2 sm:$0xff]
  %s543 = scalar_lea.vmem [#allocation2], 1
  %v544 = vld [vmem:[%s543] ss:$2 sm:$0xff]
  %s545 = scalar_lea.vmem [#allocation2], 17
  %v546 = vld [vmem:[%s545] ss:$2 sm:$0xff]
  %s547 = scalar_lea.vmem [#allocation2], 41
  %v548 = vld [vmem:[%s547] ss:$2 sm:$0xff]
  %s549 = scalar_lea.vmem [#allocation2], 57
  %v550 = vld [vmem:[%s549] ss:$2 sm:$0xff]
  %v551 = vmax.f32 %v536, %v544
  %v552 = vmax.f32 %v538, %v546
  %v553 = vmax.f32 %v540, %v548
  %v554 = vmax.f32 %v542, %v550
  %s555 = scalar_lea.vmem [#allocation2], 2
  %v556 = vld [vmem:[%s555] ss:$2 sm:$0xff]
  %s557 = scalar_lea.vmem [#allocation2], 18
  %v558 = vld [vmem:[%s557] ss:$2 sm:$0xff]
  %s559 = scalar_lea.vmem [#allocation2], 42
  %v560 = vld [vmem:[%s559] ss:$2 sm:$0xff]
  %s561 = scalar_lea.vmem [#allocation2], 58
  %v562 = vld [vmem:[%s561] ss:$2 sm:$0xff]
  %s563 = scalar_lea.vmem [#allocation2], 3
  %v564 = vld [vmem:[%s563] ss:$2 sm:$0xff]
  %s565 = scalar_lea.vmem [#allocation2], 19
  %v566 = vld [vmem:[%s565] ss:$2 sm:$0xff]
  %s567 = scalar_lea.vmem [#allocation2], 43
  %v568 = vld [vmem:[%s567] ss:$2 sm:$0xff]
  %s569 = scalar_lea.vmem [#allocation2], 59
  %v570 = vld [vmem:[%s569] ss:$2 sm:$0xff]
  %v571 = vmax.f32 %v556, %v564
  %v572 = vmax.f32 %v558, %v566
  %v573 = vmax.f32 %v560, %v568
  %v574 = vmax.f32 %v562, %v570
  %s575 = scalar_lea.vmem [#allocation2], 4
  %v576 = vld [vmem:[%s575] ss:$2 sm:$0xff]
  %s577 = scalar_lea.vmem [#allocation2], 20
  %v578 = vld [vmem:[%s577] ss:$2 sm:$0xff]
  %s579 = scalar_lea.vmem [#allocation2], 44
  %v580 = vld [vmem:[%s579] ss:$2 sm:$0xff]
  %s581 = scalar_lea.vmem [#allocation2], 60
  %v582 = vld [vmem:[%s581] ss:$2 sm:$0xff]
  %s583 = scalar_lea.vmem [#allocation2], 5
  %v584 = vld [vmem:[%s583] ss:$2 sm:$0xff]
  %s585 = scalar_lea.vmem [#allocation2], 21
  %v586 = vld [vmem:[%s585] ss:$2 sm:$0xff]
  %s587 = scalar_lea.vmem [#allocation2], 45
  %v588 = vld [vmem:[%s587] ss:$2 sm:$0xff]
  %s589 = scalar_lea.vmem [#allocation2], 61
  %v590 = vld [vmem:[%s589] ss:$2 sm:$0xff]
  %v591 = vmax.f32 %v576, %v584
  %v592 = vmax.f32 %v578, %v586
  %v593 = vmax.f32 %v580, %v588
  %v594 = vmax.f32 %v582, %v590
  %599 = vrot.lane.b32.xlu0 %v571, 4
  %v600 = vpop.permute.xlu0 %599
  %601 = vrot.lane.b32.xlu0 %v572, 4
  %v602 = vpop.permute.xlu0 %601
  %603 = vrot.lane.b32.xlu0 %v573, 4
  %v604 = vpop.permute.xlu0 %603
  %605 = vrot.lane.b32.xlu0 %v574, 4
  %v606 = vpop.permute.xlu0 %605
  %615 = vrot.lane.b32.xlu0 %v591, 8
  %v616 = vpop.permute.xlu0 %615
  %617 = vrot.lane.b32.xlu0 %v592, 8
  %v618 = vpop.permute.xlu0 %617
  %619 = vrot.lane.b32.xlu0 %v593, 8
  %v620 = vpop.permute.xlu0 %619
  %621 = vrot.lane.b32.xlu0 %v594, 8
  %v622 = vpop.permute.xlu0 %621
  %v627 = vsel %vm525, %v551, %v600
  %v628 = vsel %vm525, %v552, %v602
  %v629 = vsel %vm525, %v553, %v604
  %v630 = vsel %vm525, %v554, %v606
  %vm631 = vcmask 64512
  %v632 = vsel %vm631, %v627, %v616
  %v633 = vsel %vm631, %v628, %v618
  %v634 = vsel %vm631, %v629, %v620
  %v635 = vsel %vm631, %v630, %v622
  %v636 = vld [vmem:[%s3] sm:$0xff]
  %v637 = vld [vmem:[%s3 + $0x8] sm:$0xf]
  %v638 = vld [vmem:[%s4] sm:$0x1]
  %v640 = vperm.slane %v638, 0
  %vm642 = vcmask 97280
  %v644 = vsel %vm642, %v632, 0
  %v647 = vsel %vm642, %v633, 0
  %v650 = vsel %vm642, %v634, 0
  %v653 = vsel %vm642, %v635, 0
  %vm655 = vcmask 1043456
  %v657 = vsel %vm655, %v637, 0
  %659 = vmatpush.msra.mxu0 0.0
  %660 = vmatpush.msra.mxu0 0.0
  %661 = vmatpush.msra.mxu0 0.0
  %662 = vmatpush.msra.mxu0 0.0
  %663 = vmatpush.msra.mxu0 0.0
  %664 = vmatpush.msra.mxu0 0.0
  %665 = vmatpush.msra.mxu0 0.0
  %666 = vmatpush.msra.mxu0 0.0
  %667 = vmatpush.msra.mxu0 0.0
  %668 = vmatpush.msra.mxu0 0.0
  %669 = vmatpush.msra.mxu0 0.0
  %670 = vmatpush.msra.mxu0 0.0
  %671 = vmatpush.msra.mxu0 0.0
  %672 = vmatpush.msra.mxu0 0.0
  %673 = vmatpush.msra.mxu0 %v657
  %674 = vmatpush.msra.mxu0 %v636
  %675 = vmatmul.f32.gmra.mxu0 %v644
  %v676 = vpop.f32.mrf.mxu0
  %v677 = vadd.f32 %v640, %v676
  %678 = vmatmul.f32.gmra.mxu0 %v647
  %v679 = vpop.f32.mrf.mxu0
  %v680 = vadd.f32 %v640, %v679
  %681 = vmatmul.f32.gmra.mxu0 %v650
  %v682 = vpop.f32.mrf.mxu0
  %v683 = vadd.f32 %v640, %v682
  %684 = vmatmul.f32.gmra.mxu0 %v653
  %v685 = vpop.f32.mrf.mxu0
  %v686 = vadd.f32 %v640, %v685
  %687 = vdwg.mxu0
  %v688 = vmax.f32 %v677, 0.0
  %v689 = vmax.f32 %v680, 0.0
  %v690 = vmax.f32 %v683, 0.0
  %v691 = vmax.f32 %v686, 0.0
  %692 = vst.msk [vmem:[#allocation2] sm:$0xff] %vm525, %v688
  %693 = vst.msk [vmem:[#allocation2 + $0x8] sm:$0xff] %vm525, %v689
  %694 = vst.msk [vmem:[#allocation2 + $0x28] sm:$0xff] %vm525, %v690
  %695 = vst.msk [vmem:[#allocation2 + $0x30] sm:$0xff] %vm525, %v691
  %v696 = vld [vmem:[#allocation2] sm:$0x3]
  %v697 = vld [vmem:[#allocation2 + $0x28] sm:$0x3]
  %v698 = vsel %vm522, %v696, -inf
  %v699 = vrot.slane %v698, 4
  %v700 = vmax.f32 %v698, %v699
  %v701 = vrot.slane %v700, 2
  %v702 = vmax.f32 %v700, %v701
  %v703 = vrot.slane %v702, 1
  %v704 = vmax.f32 %v702, %v703
  %v705 = vsel %vm522, %v697, -inf
  %v706 = vrot.slane %v705, 4
  %v707 = vmax.f32 %v705, %v706
  %v708 = vrot.slane %v707, 2
  %v709 = vmax.f32 %v707, %v708
  %v710 = vrot.slane %v709, 1
  %v711 = vmax.f32 %v709, %v710
  %v712 = vld [vmem:[#allocation2 + $0x2] sm:$0x3]
  %v713 = vld [vmem:[#allocation2 + $0x2a] sm:$0x3]
  %v714 = vsel %vm522, %v712, -inf
  %v715 = vrot.slane %v714, 4
  %v716 = vmax.f32 %v714, %v715
  %v717 = vrot.slane %v716, 2
  %v718 = vmax.f32 %v716, %v717
  %v719 = vrot.slane %v718, 1
  %v720 = vmax.f32 %v718, %v719
  %v721 = vsel %vm522, %v713, -inf
  %v722 = vrot.slane %v721, 4
  %v723 = vmax.f32 %v721, %v722
  %v724 = vrot.slane %v723, 2
  %v725 = vmax.f32 %v723, %v724
  %v726 = vrot.slane %v725, 1
  %v727 = vmax.f32 %v725, %v726
  %v728 = vld [vmem:[#allocation2 + $0x4] sm:$0x3]
  %v729 = vld [vmem:[#allocation2 + $0x2c] sm:$0x3]
  %v730 = vsel %vm522, %v728, -inf
  %v731 = vrot.slane %v730, 4
  %v732 = vmax.f32 %v730, %v731
  %v733 = vrot.slane %v732, 2
  %v734 = vmax.f32 %v732, %v733
  %v735 = vrot.slane %v734, 1
  %v736 = vmax.f32 %v734, %v735
  %v737 = vsel %vm522, %v729, -inf
  %v738 = vrot.slane %v737, 4
  %v739 = vmax.f32 %v737, %v738
  %v740 = vrot.slane %v739, 2
  %v741 = vmax.f32 %v739, %v740
  %v742 = vrot.slane %v741, 1
  %v743 = vmax.f32 %v741, %v742
  %v744 = vld [vmem:[#allocation2 + $0x6] sm:$0x3]
  %v745 = vld [vmem:[#allocation2 + $0x2e] sm:$0x3]
  %v746 = vsel %vm522, %v744, -inf
  %v747 = vrot.slane %v746, 4
  %v748 = vmax.f32 %v746, %v747
  %v749 = vrot.slane %v748, 2
  %v750 = vmax.f32 %v748, %v749
  %v751 = vrot.slane %v750, 1
  %v752 = vmax.f32 %v750, %v751
  %v753 = vsel %vm522, %v745, -inf
  %v754 = vrot.slane %v753, 4
  %v755 = vmax.f32 %v753, %v754
  %v756 = vrot.slane %v755, 2
  %v757 = vmax.f32 %v755, %v756
  %v758 = vrot.slane %v757, 1
  %v759 = vmax.f32 %v757, %v758
  %v760 = vld [vmem:[#allocation2 + $0x8] sm:$0x3]
  %v761 = vld [vmem:[#allocation2 + $0x30] sm:$0x3]
  %v762 = vsel %vm522, %v760, -inf
  %v763 = vrot.slane %v762, 4
  %v764 = vmax.f32 %v762, %v763
  %v765 = vrot.slane %v764, 2
  %v766 = vmax.f32 %v764, %v765
  %v767 = vrot.slane %v766, 1
  %v768 = vmax.f32 %v766, %v767
  %v769 = vsel %vm522, %v761, -inf
  %v770 = vrot.slane %v769, 4
  %v771 = vmax.f32 %v769, %v770
  %v772 = vrot.slane %v771, 2
  %v773 = vmax.f32 %v771, %v772
  %v774 = vrot.slane %v773, 1
  %v775 = vmax.f32 %v773, %v774
  %v776 = vld [vmem:[#allocation2 + $0xa] sm:$0x3]
  %v777 = vld [vmem:[#allocation2 + $0x32] sm:$0x3]
  %v778 = vsel %vm522, %v776, -inf
  %v779 = vrot.slane %v778, 4
  %v780 = vmax.f32 %v778, %v779
  %v781 = vrot.slane %v780, 2
  %v782 = vmax.f32 %v780, %v781
  %v783 = vrot.slane %v782, 1
  %v784 = vmax.f32 %v782, %v783
  %v785 = vsel %vm522, %v777, -inf
  %v786 = vrot.slane %v785, 4
  %v787 = vmax.f32 %v785, %v786
  %v788 = vrot.slane %v787, 2
  %v789 = vmax.f32 %v787, %v788
  %v790 = vrot.slane %v789, 1
  %v791 = vmax.f32 %v789, %v790
  %v792 = vld [vmem:[#allocation2 + $0xc] sm:$0x3]
  %v793 = vld [vmem:[#allocation2 + $0x34] sm:$0x3]
  %v794 = vsel %vm522, %v792, -inf
  %v795 = vrot.slane %v794, 4
  %v796 = vmax.f32 %v794, %v795
  %v797 = vrot.slane %v796, 2
  %v798 = vmax.f32 %v796, %v797
  %v799 = vrot.slane %v798, 1
  %v800 = vmax.f32 %v798, %v799
  %v801 = vsel %vm522, %v793, -inf
  %v802 = vrot.slane %v801, 4
  %v803 = vmax.f32 %v801, %v802
  %v804 = vrot.slane %v803, 2
  %v805 = vmax.f32 %v803, %v804
  %v806 = vrot.slane %v805, 1
  %v807 = vmax.f32 %v805, %v806
  %v808 = vld [vmem:[#allocation2 + $0xe] sm:$0x3]
  %v809 = vld [vmem:[#allocation2 + $0x36] sm:$0x3]
  %v810 = vsel %vm522, %v808, -inf
  %v811 = vrot.slane %v810, 4
  %v812 = vmax.f32 %v810, %v811
  %v813 = vrot.slane %v812, 2
  %v814 = vmax.f32 %v812, %v813
  %v815 = vrot.slane %v814, 1
  %v816 = vmax.f32 %v814, %v815
  %v817 = vsel %vm522, %v809, -inf
  %v818 = vrot.slane %v817, 4
  %v819 = vmax.f32 %v817, %v818
  %v820 = vrot.slane %v819, 2
  %v821 = vmax.f32 %v819, %v820
  %v822 = vrot.slane %v821, 1
  %v823 = vmax.f32 %v821, %v822
  %vm826 = vcmask 1041409
  %v827 = vsel %vm826, %v711, %v704
  %v831 = vsel %vm826, %v727, %v720
  %832 = vrot.lane.b32.xlu0 %v831, 4
  %v833 = vpop.permute.xlu0 %832
  %v837 = vsel %vm826, %v743, %v736
  %838 = vrot.lane.b32.xlu0 %v837, 8
  %v839 = vpop.permute.xlu0 %838
  %v843 = vsel %vm826, %v759, %v752
  %844 = vrot.lane.b32.xlu0 %v843, 12
  %v845 = vpop.permute.xlu0 %844
  %v849 = vsel %vm826, %v775, %v768
  %850 = vrot.lane.b32.xlu0 %v849, 16
  %v851 = vpop.permute.xlu0 %850
  %v855 = vsel %vm826, %v791, %v784
  %856 = vrot.lane.b32.xlu0 %v855, 20
  %v857 = vpop.permute.xlu0 %856
  %v861 = vsel %vm826, %v807, %v800
  %862 = vrot.lane.b32.xlu0 %v861, 24
  %v863 = vpop.permute.xlu0 %862
  %v867 = vsel %vm826, %v823, %v816
  %868 = vrot.lane.b32.xlu0 %v867, 28
  %v869 = vpop.permute.xlu0 %868
  %v871 = vsel %vm525, %v827, %v833
  %v872 = vsel %vm631, %v871, %v839
  %v873 = vsel %vm642, %v872, %v845
  %vm874 = vcmask 130048
  %v875 = vsel %vm874, %v873, %v851
  %vm876 = vcmask 162816
  %v877 = vsel %vm876, %v875, %v857
  %vm878 = vcmask 195584
  %v879 = vsel %vm878, %v877, %v863
  %vm880 = vcmask 228352
  %v881 = vsel %vm880, %v879, %v869
  %v882 = vld [vmem:[%s5] sm:$0xff]
  %v883 = vld [vmem:[%s5 + $0x8] sm:$0xff]
  %v884 = vld [vmem:[%s5 + $0x10] sm:$0xff]
  %v885 = vld [vmem:[%s5 + $0x18] sm:$0xff]
  %v886 = vld [vmem:[%s6] sm:$0x1]
  %v888 = vperm.slane %v886, 0
  %vm890 = vcmask 261120
  %v892 = vsel %vm890, %v881, 0
  %894 = vmatpush.msra.mxu0 0.0
  %895 = vmatpush.msra.mxu0 0.0
  %896 = vmatpush.msra.mxu0 0.0
  %897 = vmatpush.msra.mxu0 0.0
  %898 = vmatpush.msra.mxu0 0.0
  %899 = vmatpush.msra.mxu0 0.0
  %900 = vmatpush.msra.mxu0 0.0
  %901 = vmatpush.msra.mxu0 0.0
  %902 = vmatpush.msra.mxu0 0.0
  %903 = vmatpush.msra.mxu0 0.0
  %904 = vmatpush.msra.mxu0 0.0
  %905 = vmatpush.msra.mxu0 0.0
  %906 = vmatpush.msra.mxu0 %v885
  %907 = vmatpush.msra.mxu0 %v884
  %908 = vmatpush.msra.mxu0 %v883
  %909 = vmatpush.msra.mxu0 %v882
  %910 = vmatmul.f32.gmra.mxu0 %v892
  %v911 = vpop.f32.mrf.mxu0
  %v912 = vadd.f32 %v888, %v911
  %913 = vdwg.mxu0
  %v914 = vmax.f32 %v912, 0.0
  %v915 = vld [vmem:[%s7] sm:$0xff]
  %v916 = vld [vmem:[%s7 + $0x8] sm:$0xff]
  %v917 = vld [vmem:[%s7 + $0x10] sm:$0xff]
  %v918 = vld [vmem:[%s7 + $0x18] sm:$0xff]
  %v919 = vld [vmem:[%s8] sm:$0x1]
  %v921 = vperm.slane %v919, 0
  %v924 = vsel %vm890, %v914, 0
  %926 = vmatpush.msra.mxu0 0.0
  %927 = vmatpush.msra.mxu0 0.0
  %928 = vmatpush.msra.mxu0 0.0
  %929 = vmatpush.msra.mxu0 0.0
  %930 = vmatpush.msra.mxu0 0.0
  %931 = vmatpush.msra.mxu0 0.0
  %932 = vmatpush.msra.mxu0 0.0
  %933 = vmatpush.msra.mxu0 0.0
  %934 = vmatpush.msra.mxu0 0.0
  %935 = vmatpush.msra.mxu0 0.0
  %936 = vmatpush.msra.mxu0 0.0
  %937 = vmatpush.msra.mxu0 0.0
  %938 = vmatpush.msra.mxu0 %v918
  %939 = vmatpush.msra.mxu0 %v917
  %940 = vmatpush.msra.mxu0 %v916
  %941 = vmatpush.msra.mxu0 %v915
  %942 = vmatmul.f32.gmra.mxu0 %v924
  %v943 = vpop.f32.mrf.mxu0
  %v944 = vadd.f32 %v921, %v943
  %945 = vdwg.mxu0
  %v946 = vmax.f32 %v944, 0.0
  %v947 = vld [vmem:[%s9] sm:$0xff]
  %v948 = vld [vmem:[%s9 + $0x8] sm:$0xff]
  %v949 = vld [vmem:[%s9 + $0x10] sm:$0xff]
  %v950 = vld [vmem:[%s9 + $0x18] sm:$0xff]
  %v951 = vld [vmem:[#allocation3] sm:$0x1]
  %v953 = vperm.slane %v951, 0
  %v956 = vsel %vm890, %v946, 0
  %958 = vmatpush.msra.mxu0 0.0
  %959 = vmatpush.msra.mxu0 0.0
  %960 = vmatpush.msra.mxu0 0.0
  %961 = vmatpush.msra.mxu0 0.0
  %962 = vmatpush.msra.mxu0 0.0
  %963 = vmatpush.msra.mxu0 0.0
  %964 = vmatpush.msra.mxu0 0.0
  %965 = vmatpush.msra.mxu0 0.0
  %966 = vmatpush.msra.mxu0 0.0
  %967 = vmatpush.msra.mxu0 0.0
  %968 = vmatpush.msra.mxu0 0.0
  %969 = vmatpush.msra.mxu0 0.0
  %970 = vmatpush.msra.mxu0 %v950
  %971 = vmatpush.msra.mxu0 %v949
  %972 = vmatpush.msra.mxu0 %v948
  %973 = vmatpush.msra.mxu0 %v947
  %974 = vmatmul.f32.gmra.mxu0 %v956
  %v975 = vpop.f32.mrf.mxu0
  %v976 = vadd.f32 %v953, %v975
  %977 = vdwg.mxu0
  %vm978 = vcmask 1024
  %979 = vst.msk [vmem:[%s11] sm:$0x3] %vm978, %v976
  // Predicated region
  $region46: #{tpu_custom_call.1} parent=0 // pred_check
    _
  $region47: #{tpu_custom_call.1} parent=0 // pred_check_branch
    %981 = sbr.rel (0) target = $region49
  $region48: #{tpu_custom_call.1} parent=0 // pred_region
    _
  $region49: #{tpu_custom_call.1} parent=0 // pred_fallthru
    _
  // Predicated region
  $region50: #{tpu_custom_call.1} parent=0 // pred_check
    _
  $region51: #{tpu_custom_call.1} parent=0 // pred_check_branch
    %983 = sbr.rel (0) target = $region53
  $region52: #{tpu_custom_call.1} parent=0 // pred_region
    _
  $region53: #{tpu_custom_call.1} parent=0 // pred_fallthru
    _

</llo_original>
